<compile_context>
chip_gen: v6e
topology: v6e:2x2x1
jax: 0.10.0
libtpu: 0.0.40
codegen_flags: <defaults>
</compile_context>

<pallas_src>
import jax
import jax.numpy as jnp
from jax.experimental import pallas as pl
from jax.experimental.pallas import tpu as pltpu

NC_PAD = 128          # class axis padded to one full lane width
NEG_INF_BIAS = -1e30  # bias for padded (fake) classes -> never win max / contribute to LSE


def _round_up(x, m):
    return (x + m - 1) // m * m


def _cdiv(a, b):
    return -(-a // b)


def _vmem_capacity_bytes():
    """Physical per-core VMEM (generation aware); conservative 64 MiB (v7x) fallback."""
    try:
        info = pltpu.get_tpu_info()
        cap = getattr(info, "vmem_capacity_bytes", None)
        if cap:
            return int(cap)
    except Exception:
        pass
    return 64 << 20


def _make_kernel(tile_k, d_total, w_resident, ragged_k):
    def kernel(x_ref, w_ref, b_ref, labels_ref, out_ref, acc_ref):
        # x_ref:      (TILE_B, TILE_K)               input block (f32 or bf16)
        # w_ref:      (D_padk, 128) or (TILE_K, 128) classifier weight (resident / streamed)
        # b_ref:      (1, 128)      f32              bias (padded classes = -1e30)
        # labels_ref: (TILE_B, 1)   int32            class indices
        # out_ref:    (TILE_B, 1)   f32              -CE per sample
        # acc_ref:    (TILE_B, 128) f32              logits accumulator (VMEM scratch)
        k = pl.program_id(1)
        nk = pl.num_programs(1)

        @pl.when(k == 0)
        def _init():
            acc_ref[...] = jnp.zeros_like(acc_ref)

        xv = x_ref[...]
        if ragged_k:
            # The last K slab overhangs D: zero the out-of-range feature columns so the
            # zero-padded weight rows see exact (finite) zeros; avoids padding x in HBM.
            col = k * tile_k + jax.lax.broadcasted_iota(jnp.int32, xv.shape, 1)
            xv = jnp.where(col < d_total, xv, jnp.zeros_like(xv))

        if w_resident:
            start = pl.multiple_of(k * tile_k, tile_k)
            w = w_ref[pl.ds(start, tile_k), :]
        else:
            w = w_ref[...]

        acc_ref[...] += jnp.dot(xv, w, preferred_element_type=jnp.float32)

        @pl.when(k == nk - 1)
        def _finish():
            logits = acc_ref[...] + b_ref[...]                       # (TILE_B, 128) f32
            m = jnp.max(logits, axis=-1, keepdims=True)
            lse = m + jnp.log(jnp.sum(jnp.exp(logits - m), axis=-1, keepdims=True))

            labels = labels_ref[...]                                 # (TILE_B, 1)
            class_ids = jax.lax.broadcasted_iota(jnp.int32, logits.shape, 1)
            picked = jnp.sum(jnp.where(class_ids == labels, logits, 0.0),
                             axis=-1, keepdims=True)

            # -CrossEntropy = logit[label] - logsumexp(logits); tiny (TILE_B, 1) store.
            out_ref[...] = picked - lse

    return kernel


def neg_cross_entropy_loss(images, labels, weight, bias, *,
                           tile_b=512, tile_k=4096, use_bf16_inputs=False):
    """Equivalent of CrossEntropyLoss(classifier).forward(images, labels).

    images: (B, C, H, W) float32 (NCHW)
    labels: (B,) int32 in [0, NUM_CLASSES)
    weight: (D, NUM_CLASSES) float32, D = C*H*W
    bias:   (NUM_CLASSES,)  float32
    returns (B,) float32 = -CrossEntropyLoss(reduction='none')
    """
    B = images.shape[0]
    D, NC = weight.shape
    assert NC <= NC_PAD, "kernel assumes NUM_CLASSES <= 128"

    in_dtype = jnp.bfloat16 if use_bf16_inputs else jnp.float32
    in_itemsize = jnp.dtype(in_dtype).itemsize

    # Flatten exactly like torch .view(B, -1); no feature-axis padding copy of x.
    x = images.reshape(B, D).astype(in_dtype)
    labels2d = labels.astype(jnp.int32).reshape(B, 1)

    # ---- tile sizes -----------------------------------------------------------
    tile_b = max(8, _round_up(min(tile_b, B), 8))
    tile_k = max(128, min(_round_up(tile_k, 128), _round_up(D, 128)))

    # ---- generation-aware VMEM planning --------------------------------------
    vmem_cap = _vmem_capacity_bytes()            # 128 MiB (v5e/v6e) or 64 MiB (v7x)
    vmem_target = (vmem_cap * 7) // 10           # leave headroom for the compiler

    def _vmem_plan(tb, tk, resident):
        nkk = _cdiv(D, tk)
        w_rows = nkk * tk if resident else tk
        return (2 * tb * tk * in_itemsize                # x, double-buffered
                + 2 * w_rows * NC_PAD * in_itemsize      # weight buffers (2x, see TODO)
                + tb * NC_PAD * 4                        # f32 accumulator scratch
                + 2 * (tb * 4 + tb * 4 + NC_PAD * 4))    # out / labels / bias

    headroom = 2 << 20
    w_resident = _vmem_plan(tile_b, tile_k, True) + headroom <= vmem_target
    # If even the streamed plan would not fit (user-supplied huge tiles), shrink K tiles.
    while (not w_resident
           and _vmem_plan(tile_b, tile_k, False) + headroom > vmem_target
           and tile_k > 512):
        tile_k = max(512, tile_k // 2)

    nk = _cdiv(D, tile_k)
    D_padk = nk * tile_k
    ragged_k = D_padk != D

    # ---- batch padding: only up to a sublane multiple (8), never to tile_b ----
    B_pad = _round_up(B, 8)
    if B_pad != B:
        x = jnp.pad(x, ((0, B_pad - B), (0, 0)))
        labels2d = jnp.pad(labels2d, ((0, B_pad - B), (0, 0)))
    nb = _cdiv(B_pad, tile_b)

    # v7x has two TensorCores and only the batch axis is "parallel": when the weight is
    # resident (so splitting adds no HBM traffic) make sure there are >= 2 batch tiles.
    if w_resident and nb == 1 and B_pad >= 16:
        tile_b = max(8, _round_up(_cdiv(B_pad, 2), 8))
        nb = _cdiv(B_pad, tile_b)

    # ---- small operands (only weight / bias get padded copies) ----------------
    w = jnp.pad(weight.astype(jnp.float32),
                ((0, D_padk - D), (0, NC_PAD - NC))).astype(in_dtype)
    b2d = jnp.full((1, NC_PAD), NEG_INF_BIAS, dtype=jnp.float32)
    b2d = b2d.at[0, :NC].set(bias.astype(jnp.float32))

    if w_resident:
        # Fetched once (constant block index); stays VMEM-resident across the whole grid.
        w_spec = pl.BlockSpec((D_padk, NC_PAD), lambda bi, ki: (0, 0))
    else:
        # Streamed (tile_k, 128) slabs along K; re-fetched once per batch tile.
        w_spec = pl.BlockSpec((tile_k, NC_PAD), lambda bi, ki: (ki, 0))

    vmem_used = _vmem_plan(tile_b, tile_k, w_resident) + headroom
    vmem_limit = int(min((vmem_cap * 17) // 20,
                         max(32 << 20, vmem_used + (8 << 20))))

    cost = pl.CostEstimate(
        flops=int(2 * B_pad * D_padk * NC_PAD),
        transcendentals=int(B_pad * (NC_PAD + 1)),
        bytes_accessed=int(x.size * in_itemsize
                           + (1 if w_resident else nb) * w.size * in_itemsize
                           + b2d.size * 4 + labels2d.size * 4 + B_pad * 4),
    )

    out = pl.pallas_call(
        _make_kernel(tile_k, D, w_resident, ragged_k),
        out_shape=jax.ShapeDtypeStruct((B_pad, 1), jnp.float32),
        grid_spec=pltpu.PrefetchScalarGridSpec(
            num_scalar_prefetch=0,
            grid=(nb, nk),
            in_specs=[
                pl.BlockSpec((tile_b, tile_k), lambda bi, ki: (bi, ki)),
                w_spec,
                pl.BlockSpec((1, NC_PAD), lambda bi, ki: (0, 0)),
                pl.BlockSpec((tile_b, 1), lambda bi, ki: (bi, 0)),
            ],
            out_specs=pl.BlockSpec((tile_b, 1), lambda bi, ki: (bi, 0)),
            scratch_shapes=[pltpu.VMEM((tile_b, NC_PAD), jnp.float32)],
        ),
        compiler_params=pltpu.CompilerParams(
            dimension_semantics=("parallel", "arbitrary"),
            vmem_limit_bytes=vmem_limit,
        ),
        cost_estimate=cost,
    )(x, w, b2d, labels2d)

    return out[:B, 0]


def _reference(images, labels, weight, bias):
    B = images.shape[0]
    x = images.reshape(B, -1).astype(jnp.float32)
    logits = x @ weight + bias
    logp = jax.nn.log_softmax(logits, axis=-1)
    ce = -jnp.take_along_axis(logp, labels.reshape(B, 1), axis=-1)[:, 0]
    return -ce


if __name__ == "__main__":
    # Small, deterministic synthetic setup: batch=2, channels=4, spatial=16x16, 10 classes.
    key = jax.random.PRNGKey(0)
    k_img, k_w, k_b, k_lbl = jax.random.split(key, 4)

    B, C, H, W = 2, 4, 16, 16
    NUM_CLASSES = 10
    D = C * H * W

    images = jax.random.normal(k_img, (B, C, H, W), dtype=jnp.float32)
    labels = jax.random.randint(k_lbl, (B,), 0, NUM_CLASSES, dtype=jnp.int32)

    # Deterministic linear-classifier parameters (synthetic, not loaded from a checkpoint).
    weight = jax.random.normal(k_w, (D, NUM_CLASSES), dtype=jnp.float32) * 0.02
    bias = jax.random.normal(k_b, (NUM_CLASSES,), dtype=jnp.float32) * 0.01

    out = neg_cross_entropy_loss(images, labels, weight, bias)
    out = jax.block_until_ready(out)

    ref = _reference(images, labels, weight, bias)
    assert out.shape == (B,)
    assert jnp.allclose(out, ref, atol=1e-4, rtol=1e-4), (out, ref)

    print("KERNEL_OK")
</pallas_src>

<mosaic_0001>
module attributes {stable_mosaic.version = 11 : i64} {
  func.func @kernel(%arg0: i32, %arg1: i32, %arg2: memref<8x1024xf32, #tpu.memory_space<vmem>>, %arg3: memref<1024x128xf32, #tpu.memory_space<vmem>>, %arg4: memref<1x128xf32, #tpu.memory_space<vmem>>, %arg5: memref<8x1xi32, #tpu.memory_space<vmem>>, %arg6: memref<8x1xf32, #tpu.memory_space<vmem>>, %arg7: memref<8x128xf32, #tpu.memory_space<vmem>>) attributes {dimension_semantics = [#tpu.dimension_semantics<parallel>, #tpu.dimension_semantics<arbitrary>], iteration_bounds = array<i64: 1, 1>, scalar_prefetch = 0 : i64, scratch_operands = 1 : i64, tpu.core_type = #tpu.core_type<tc>, window_params = [{transform_indices = @transform_0, window_bounds = array<i64: 8, 1024>}, {pipeline_mode = #tpu.pipeline_mode<synchronous>, transform_indices = @transform_1, window_bounds = array<i64: 1024, 128>}, {pipeline_mode = #tpu.pipeline_mode<synchronous>, transform_indices = @transform_2, window_bounds = array<i64: 1, 128>}, {transform_indices = @transform_3, window_bounds = array<i64: 8, 1>}, {transform_indices = @transform_4, window_bounds = array<i64: 8, 1>}]} {
    %c0_i32 = arith.constant 0 : i32
    %0 = arith.cmpi eq, %arg1, %c0_i32 : i32
    %1 = arith.extui %0 : i1 to i32
    %c0_i32_0 = arith.constant 0 : i32
    %2 = arith.cmpi ne, %1, %c0_i32_0 : i32
    scf.if %2 {
      %cst_9 = arith.constant 0.000000e+00 : f32
      %15 = vector.broadcast %cst_9 : f32 to vector<8x128xf32>
      %c0_10 = arith.constant 0 : index
      %c0_11 = arith.constant 0 : index
      %16 = vector.load %arg7[%c0_10, %c0_11] : memref<8x128xf32, #tpu.memory_space<vmem>>, vector<8x128xf32>
      tpu.vector_store %arg7[%c0_10, %c0_11], %15 {strides = array<i32>} : memref<8x128xf32, #tpu.memory_space<vmem>>, vector<8x128xf32>,
    } else {
    }
    %c0 = arith.constant 0 : index
    %c0_1 = arith.constant 0 : index
    %3 = vector.load %arg2[%c0, %c0_1] : memref<8x1024xf32, #tpu.memory_space<vmem>>, vector<8x1024xf32>
    %c1024_i32 = arith.constant 1024 : i32
    %4 = arith.muli %arg1, %c1024_i32 : i32
    %5 = tpu.assume_multiple %4, 1024 : i32
    %6 = arith.index_cast %5 : i32 to index
    %c0_2 = arith.constant 0 : index
    %7 = vector.load %arg3[%6, %c0_2] : memref<1024x128xf32, #tpu.memory_space<vmem>>, vector<1024x128xf32>
    %c0_3 = arith.constant 0 : index
    %c0_4 = arith.constant 0 : index
    %8 = vector.load %arg7[%c0_3, %c0_4] : memref<8x128xf32, #tpu.memory_space<vmem>>, vector<8x128xf32>
    %cst = arith.constant dense<0.000000e+00> : vector<8x128xf32>
    %9 = tpu.matmul %3, %7, %cst {dimension_numbers = #tpu.dot_dimension_numbers<[1], [0], [0], [1], [0, 0, 1, 1], [], []>} : vector<8x1024xf32>, vector<1024x128xf32>, vector<8x128xf32> -> vector<8x128xf32>
    %10 = arith.addf %8, %9 : vector<8x128xf32>
    %c0_5 = arith.constant 0 : index
    %c0_6 = arith.constant 0 : index
    %11 = vector.load %arg7[%c0_5, %c0_6] : memref<8x128xf32, #tpu.memory_space<vmem>>, vector<8x128xf32>
    tpu.vector_store %arg7[%c0_5, %c0_6], %10 {strides = array<i32>} : memref<8x128xf32, #tpu.memory_space<vmem>>, vector<8x128xf32>,
    %c0_i32_7 = arith.constant 0 : i32
    %12 = arith.cmpi eq, %arg1, %c0_i32_7 : i32
    %13 = arith.extui %12 : i1 to i32
    %c0_i32_8 = arith.constant 0 : i32
    %14 = arith.cmpi ne, %13, %c0_i32_8 : i32
    scf.if %14 {
      %c0_9 = arith.constant 0 : index
      %c0_10 = arith.constant 0 : index
      %15 = vector.load %arg7[%c0_9, %c0_10] : memref<8x128xf32, #tpu.memory_space<vmem>>, vector<8x128xf32>
      %c0_11 = arith.constant 0 : index
      %c0_12 = arith.constant 0 : index
      %16 = vector.load %arg4[%c0_11, %c0_12] : memref<1x128xf32, #tpu.memory_space<vmem>>, vector<1x128xf32>
      %17 = vector.broadcast %16 : vector<1x128xf32> to vector<8x128xf32>
      %18 = arith.addf %15, %17 : vector<8x128xf32>
      %cst_13 = arith.constant dense<0xFF800000> : vector<8xf32>
      %19 = vector.multi_reduction <maximumf>, %18, %cst_13 [1] : vector<8x128xf32> to vector<8xf32>
      %20 = vector.shape_cast %19 : vector<8xf32> to vector<8x1xf32>
      %21 = vector.broadcast %20 : vector<8x1xf32> to vector<8x128xf32>
      %22 = arith.subf %18, %21 : vector<8x128xf32>
      %23 = math.exp %22 : vector<8x128xf32>
      %cst_14 = arith.constant dense<0.000000e+00> : vector<8xf32>
      %24 = vector.multi_reduction <add>, %23, %cst_14 [1] : vector<8x128xf32> to vector<8xf32>
      %25 = vector.shape_cast %24 : vector<8xf32> to vector<8x1xf32>
      %26 = math.log %25 : vector<8x1xf32>
      %27 = arith.addf %20, %26 : vector<8x1xf32>
      %c0_15 = arith.constant 0 : index
      %c0_16 = arith.constant 0 : index
      %28 = vector.load %arg5[%c0_15, %c0_16] : memref<8x1xi32, #tpu.memory_space<vmem>>, vector<8x1xi32>
      %29 = tpu.iota {dimensions = array<i32: 1>} : vector<8x128xi32>
      %30 = vector.broadcast %28 : vector<8x1xi32> to vector<8x128xi32>
      %31 = arith.cmpi eq, %29, %30 : vector<8x128xi32>
      %cst_17 = arith.constant 0.000000e+00 : f32
      %32 = vector.broadcast %cst_17 : f32 to vector<8x128xf32>
      %33 = arith.select %31, %18, %32 : vector<8x128xi1>, vector<8x128xf32>
      %cst_18 = arith.constant dense<0.000000e+00> : vector<8xf32>
      %34 = vector.multi_reduction <add>, %33, %cst_18 [1] : vector<8x128xf32> to vector<8xf32>
      %35 = vector.shape_cast %34 : vector<8xf32> to vector<8x1xf32>
      %36 = arith.subf %35, %27 : vector<8x1xf32>
      %c0_19 = arith.constant 0 : index
      %c0_20 = arith.constant 0 : index
      %37 = vector.load %arg6[%c0_19, %c0_20] : memref<8x1xf32, #tpu.memory_space<vmem>>, vector<8x1xf32>
      tpu.vector_store %arg6[%c0_19, %c0_20], %36 {strides = array<i32>} : memref<8x1xf32, #tpu.memory_space<vmem>>, vector<8x1xf32>,
    } else {
    }
    return
  }
  func.func @transform_0(%arg0: i32, %arg1: i32) -> (i32, i32) {
    %c0_i32 = arith.constant 0 : i32
    return %arg0, %arg1 : i32, i32
  }
  func.func @transform_1(%arg0: i32, %arg1: i32) -> (i32, i32) {
    %c0_i32 = arith.constant 0 : i32
    %c0_i32_0 = arith.constant 0 : i32
    %c0_i32_1 = arith.constant 0 : i32
    return %c0_i32, %c0_i32_0 : i32, i32
  }
  func.func @transform_2(%arg0: i32, %arg1: i32) -> (i32, i32) {
    %c0_i32 = arith.constant 0 : i32
    %c0_i32_0 = arith.constant 0 : i32
    %c0_i32_1 = arith.constant 0 : i32
    return %c0_i32, %c0_i32_0 : i32, i32
  }
  func.func @transform_3(%arg0: i32, %arg1: i32) -> (i32, i32) {
    %c0_i32 = arith.constant 0 : i32
    %c0_i32_0 = arith.constant 0 : i32
    return %arg0, %c0_i32 : i32, i32
  }
  func.func @transform_4(%arg0: i32, %arg1: i32) -> (i32, i32) {
    %c0_i32 = arith.constant 0 : i32
    %c0_i32_0 = arith.constant 0 : i32
    return %arg0, %c0_i32 : i32, i32
  }
}

</mosaic_0001>

<llo_original>
// kernel: tpu_custom_call.1
$region0: #{tpu_custom_call.1}
  #allocation0 [shape = 'u32[]', space=smem, size = 0x4, offset = 0x4, fixed_abs, tag = 'smem constant byte address 0x4 - core index']
  #allocation1 [shape = 'u32[144,128]{1,0:T(1,128)}', space=vmem, size = 0x12000, scoped, tag = 'internal scratch']
  #allocation2 [shape = 'f32[8,128]{1,0:T(8,128)}', space=vmem, size = 0x1000, scoped, tag = 'scratch operand']
  %s0 = inlined_call_operand.hbm [shape: f32[8,1024], index: 0, kind: input, shape index: {}]
  %s1 = inlined_call_operand.hbm [shape: f32[1024,128], index: 1, kind: input, shape index: {}]
  %s2 = inlined_call_operand.vmem [shape: f32[1,128], index: 2, kind: input, shape index: {}]
  %s3 = inlined_call_operand.vmem [shape: s32[8,1], index: 3, kind: input, shape index: {}]
  %s4 = inlined_call_operand.vmem [shape: f32[8,1], index: 4, kind: output, shape index: {}]
  %s5 = sld [smem:[#allocation0]]
  $region42: #{tpu_custom_call.1} parent=0
    _
  %s7 = ssub.s32 1, %s5
  %s8 = scalar_select 0, %s7, %s5
  $region1: #{tpu_custom_call.1} parent=0
    #allocation3 [shape = 'u8[32768]{0}', space=vmem, size = 0x8000, scoped, tag = 'input window, operand 0, single buffered']
    #allocation4 [shape = 's32[1]{0}', space=sflag, size = 0x4, scoped, tag = 'scoped memory for tpu_custom_call.1']
    #allocation5 [shape = 'u8[524288]{0}', space=vmem, size = 0x80000, scoped, tag = 'input window, operand 1, single buffered']
    #allocation6 [shape = 's32[1]{0}', space=sflag, size = 0x4, scoped, tag = 'scoped memory for tpu_custom_call.1']
    %9 = vsyncpa [#allocation4], 0
    %10 = vsyncpa [#allocation6], 0
    // Predicated region
    $region2: #{tpu_custom_call.1} parent=1 // pred_check
      _
    $region3: #{tpu_custom_call.1} parent=1 // pred_check_branch
      %12 = sbr.rel (0) target = $region5
    $region4: #{tpu_custom_call.1} parent=1 // pred_region
      %s14 = ssub.s32 1024, 1024
      %15 = vsyncadd [#allocation4], %s14
      %s17 = sshll.u32 [#allocation3], 4
      %s18 = int_to_ptr.vmem [resolvable:$true] %s17
      %20 = dma.hbm_to_vmem [thread:$0]  %s0, 1024, %s18, [#allocation4]
    $region5: #{tpu_custom_call.1} parent=1 // pred_fallthru
      _
    // Predicated region
    $region6: #{tpu_custom_call.1} parent=1 // pred_check
      _
    $region7: #{tpu_custom_call.1} parent=1 // pred_check_branch
      %22 = sbr.rel (0) target = $region9
    $region8: #{tpu_custom_call.1} parent=1 // pred_region
      %s24 = ssub.s32 16384, 16384
      %25 = vsyncadd [#allocation6], %s24
      %s26 = sshll.u32 [#allocation5], 4
      %s27 = int_to_ptr.vmem [resolvable:$true] %s26
      %32 = dma.hbm_to_vmem [thread:$0]  %s1, 16384, %s27, [#allocation6], 128, 128, 8
    $region9: #{tpu_custom_call.1} parent=1 // pred_fallthru
      _
    // Predicated region
    $region10: #{tpu_custom_call.1} parent=1 // pred_check
      _
    $region11: #{tpu_custom_call.1} parent=1 // pred_check_branch
      %34 = sbr.rel (0) target = $region13
    $region12: #{tpu_custom_call.1} parent=1 // pred_region
      _
    $region13: #{tpu_custom_call.1} parent=1 // pred_fallthru
      _
    // Predicated region
    $region14: #{tpu_custom_call.1} parent=1 // pred_check
      _
    $region15: #{tpu_custom_call.1} parent=1 // pred_check_branch
      %36 = sbr.rel (0) target = $region17
    $region16: #{tpu_custom_call.1} parent=1 // pred_region
      _
    $region17: #{tpu_custom_call.1} parent=1 // pred_fallthru
      _
    // Predicated region
    $region18: #{tpu_custom_call.1} parent=1 // pred_check
      _
    $region19: #{tpu_custom_call.1} parent=1 // pred_check_branch
      %38 = sbr.rel (0) target = $region21
    $region20: #{tpu_custom_call.1} parent=1 // pred_region
      %39 = dma.done [#allocation4], 1024
    $region21: #{tpu_custom_call.1} parent=1 // pred_fallthru
      _
    // Predicated region
    $region22: #{tpu_custom_call.1} parent=1 // pred_check
      _
    $region23: #{tpu_custom_call.1} parent=1 // pred_check_branch
      %41 = sbr.rel (0) target = $region25
    $region24: #{tpu_custom_call.1} parent=1 // pred_region
      %42 = dma.done [#allocation6], 16384
    $region25: #{tpu_custom_call.1} parent=1 // pred_fallthru
      _
    %p43 = scmp.eq.s32.totalorder 0, 0
    // Predicated region
    $region26: #{tpu_custom_call.1} parent=1 // pred_check
      %p44 = pneg %p43
    $region27: #{tpu_custom_call.1} parent=1 // pred_check_branch
      %46 = sbr.rel (%p44) target = $region29
    $region28: #{tpu_custom_call.1} parent=1 // pred_region
      %47 = vst [vmem:[#allocation2] sm:$0xff] 0.0
    $region29: #{tpu_custom_call.1} parent=1 // pred_fallthru
      _
    %v48 = vld [vmem:[#allocation3] sm:$0xff]
    %v49 = vld [vmem:[#allocation3 + $0x8] sm:$0xff]
    %v50 = vld [vmem:[#allocation3 + $0x10] sm:$0xff]
    %v51 = vld [vmem:[#allocation3 + $0x18] sm:$0xff]
    %v52 = vld [vmem:[#allocation3 + $0x20] sm:$0xff]
    %v53 = vld [vmem:[#allocation3 + $0x28] sm:$0xff]
    %v54 = vld [vmem:[#allocation3 + $0x30] sm:$0xff]
    %v55 = vld [vmem:[#allocation3 + $0x38] sm:$0xff]
    %s56 = smul.u32 0, 1024
    %s57 = scalar_lea.vmem [#allocation5], %s56
    %v58 = vld [vmem:[%s57] sm:$0xff]
    %v59 = vld [vmem:[%s57 + $0x8] sm:$0xff]
    %v60 = vld [vmem:[%s57 + $0x10] sm:$0xff]
    %v61 = vld [vmem:[%s57 + $0x18] sm:$0xff]
    %v62 = vld [vmem:[%s57 + $0x20] sm:$0xff]
    %v63 = vld [vmem:[%s57 + $0x28] sm:$0xff]
    %v64 = vld [vmem:[%s57 + $0x30] sm:$0xff]
    %v65 = vld [vmem:[%s57 + $0x38] sm:$0xff]
    %v66 = vld [vmem:[%s57 + $0x40] sm:$0xff]
    %v67 = vld [vmem:[%s57 + $0x48] sm:$0xff]
    %v68 = vld [vmem:[%s57 + $0x50] sm:$0xff]
    %v69 = vld [vmem:[%s57 + $0x58] sm:$0xff]
    %v70 = vld [vmem:[%s57 + $0x60] sm:$0xff]
    %v71 = vld [vmem:[%s57 + $0x68] sm:$0xff]
    %v72 = vld [vmem:[%s57 + $0x70] sm:$0xff]
    %v73 = vld [vmem:[%s57 + $0x78] sm:$0xff]
    %v74 = vld [vmem:[%s57 + $0x80] sm:$0xff]
    %v75 = vld [vmem:[%s57 + $0x88] sm:$0xff]
    %v76 = vld [vmem:[%s57 + $0x90] sm:$0xff]
    %v77 = vld [vmem:[%s57 + $0x98] sm:$0xff]
    %v78 = vld [vmem:[%s57 + $0xa0] sm:$0xff]
    %v79 = vld [vmem:[%s57 + $0xa8] sm:$0xff]
    %v80 = vld [vmem:[%s57 + $0xb0] sm:$0xff]
    %v81 = vld [vmem:[%s57 + $0xb8] sm:$0xff]
    %v82 = vld [vmem:[%s57 + $0xc0] sm:$0xff]
    %v83 = vld [vmem:[%s57 + $0xc8] sm:$0xff]
    %v84 = vld [vmem:[%s57 + $0xd0] sm:$0xff]
    %v85 = vld [vmem:[%s57 + $0xd8] sm:$0xff]
    %v86 = vld [vmem:[%s57 + $0xe0] sm:$0xff]
    %v87 = vld [vmem:[%s57 + $0xe8] sm:$0xff]
    %v88 = vld [vmem:[%s57 + $0xf0] sm:$0xff]
    %v89 = vld [vmem:[%s57 + $0xf8] sm:$0xff]
    %v90 = vld [vmem:[%s57 + $0x100] sm:$0xff]
    %v91 = vld [vmem:[%s57 + $0x108] sm:$0xff]
    %v92 = vld [vmem:[%s57 + $0x110] sm:$0xff]
    %v93 = vld [vmem:[%s57 + $0x118] sm:$0xff]
    %v94 = vld [vmem:[%s57 + $0x120] sm:$0xff]
    %v95 = vld [vmem:[%s57 + $0x128] sm:$0xff]
    %v96 = vld [vmem:[%s57 + $0x130] sm:$0xff]
    %v97 = vld [vmem:[%s57 + $0x138] sm:$0xff]
    %v98 = vld [vmem:[%s57 + $0x140] sm:$0xff]
    %v99 = vld [vmem:[%s57 + $0x148] sm:$0xff]
    %v100 = vld [vmem:[%s57 + $0x150] sm:$0xff]
    %v101 = vld [vmem:[%s57 + $0x158] sm:$0xff]
    %v102 = vld [vmem:[%s57 + $0x160] sm:$0xff]
    %v103 = vld [vmem:[%s57 + $0x168] sm:$0xff]
    %v104 = vld [vmem:[%s57 + $0x170] sm:$0xff]
    %v105 = vld [vmem:[%s57 + $0x178] sm:$0xff]
    %v106 = vld [vmem:[%s57 + $0x180] sm:$0xff]
    %v107 = vld [vmem:[%s57 + $0x188] sm:$0xff]
    %v108 = vld [vmem:[%s57 + $0x190] sm:$0xff]
    %v109 = vld [vmem:[%s57 + $0x198] sm:$0xff]
    %v110 = vld [vmem:[%s57 + $0x1a0] sm:$0xff]
    %v111 = vld [vmem:[%s57 + $0x1a8] sm:$0xff]
    %v112 = vld [vmem:[%s57 + $0x1b0] sm:$0xff]
    %v113 = vld [vmem:[%s57 + $0x1b8] sm:$0xff]
    %v114 = vld [vmem:[%s57 + $0x1c0] sm:$0xff]
    %v115 = vld [vmem:[%s57 + $0x1c8] sm:$0xff]
    %v116 = vld [vmem:[%s57 + $0x1d0] sm:$0xff]
    %v117 = vld [vmem:[%s57 + $0x1d8] sm:$0xff]
    %v118 = vld [vmem:[%s57 + $0x1e0] sm:$0xff]
    %v119 = vld [vmem:[%s57 + $0x1e8] sm:$0xff]
    %v120 = vld [vmem:[%s57 + $0x1f0] sm:$0xff]
    %v121 = vld [vmem:[%s57 + $0x1f8] sm:$0xff]
    %v122 = vld [vmem:[%s57 + $0x200] sm:$0xff]
    %v123 = vld [vmem:[%s57 + $0x208] sm:$0xff]
    %v124 = vld [vmem:[%s57 + $0x210] sm:$0xff]
    %v125 = vld [vmem:[%s57 + $0x218] sm:$0xff]
    %v126 = vld [vmem:[%s57 + $0x220] sm:$0xff]
    %v127 = vld [vmem:[%s57 + $0x228] sm:$0xff]
    %v128 = vld [vmem:[%s57 + $0x230] sm:$0xff]
    %v129 = vld [vmem:[%s57 + $0x238] sm:$0xff]
    %v130 = vld [vmem:[%s57 + $0x240] sm:$0xff]
    %v131 = vld [vmem:[%s57 + $0x248] sm:$0xff]
    %v132 = vld [vmem:[%s57 + $0x250] sm:$0xff]
    %v133 = vld [vmem:[%s57 + $0x258] sm:$0xff]
    %v134 = vld [vmem:[%s57 + $0x260] sm:$0xff]
    %v135 = vld [vmem:[%s57 + $0x268] sm:$0xff]
    %v136 = vld [vmem:[%s57 + $0x270] sm:$0xff]
    %v137 = vld [vmem:[%s57 + $0x278] sm:$0xff]
    %v138 = vld [vmem:[%s57 + $0x280] sm:$0xff]
    %v139 = vld [vmem:[%s57 + $0x288] sm:$0xff]
    %v140 = vld [vmem:[%s57 + $0x290] sm:$0xff]
    %v141 = vld [vmem:[%s57 + $0x298] sm:$0xff]
    %v142 = vld [vmem:[%s57 + $0x2a0] sm:$0xff]
    %v143 = vld [vmem:[%s57 + $0x2a8] sm:$0xff]
    %v144 = vld [vmem:[%s57 + $0x2b0] sm:$0xff]
    %v145 = vld [vmem:[%s57 + $0x2b8] sm:$0xff]
    %v146 = vld [vmem:[%s57 + $0x2c0] sm:$0xff]
    %v147 = vld [vmem:[%s57 + $0x2c8] sm:$0xff]
    %v148 = vld [vmem:[%s57 + $0x2d0] sm:$0xff]
    %v149 = vld [vmem:[%s57 + $0x2d8] sm:$0xff]
    %v150 = vld [vmem:[%s57 + $0x2e0] sm:$0xff]
    %v151 = vld [vmem:[%s57 + $0x2e8] sm:$0xff]
    %v152 = vld [vmem:[%s57 + $0x2f0] sm:$0xff]
    %v153 = vld [vmem:[%s57 + $0x2f8] sm:$0xff]
    %v154 = vld [vmem:[%s57 + $0x300] sm:$0xff]
    %v155 = vld [vmem:[%s57 + $0x308] sm:$0xff]
    %v156 = vld [vmem:[%s57 + $0x310] sm:$0xff]
    %v157 = vld [vmem:[%s57 + $0x318] sm:$0xff]
    %v158 = vld [vmem:[%s57 + $0x320] sm:$0xff]
    %v159 = vld [vmem:[%s57 + $0x328] sm:$0xff]
    %v160 = vld [vmem:[%s57 + $0x330] sm:$0xff]
    %v161 = vld [vmem:[%s57 + $0x338] sm:$0xff]
    %v162 = vld [vmem:[%s57 + $0x340] sm:$0xff]
    %v163 = vld [vmem:[%s57 + $0x348] sm:$0xff]
    %v164 = vld [vmem:[%s57 + $0x350] sm:$0xff]
    %v165 = vld [vmem:[%s57 + $0x358] sm:$0xff]
    %v166 = vld [vmem:[%s57 + $0x360] sm:$0xff]
    %v167 = vld [vmem:[%s57 + $0x368] sm:$0xff]
    %v168 = vld [vmem:[%s57 + $0x370] sm:$0xff]
    %v169 = vld [vmem:[%s57 + $0x378] sm:$0xff]
    %v170 = vld [vmem:[%s57 + $0x380] sm:$0xff]
    %v171 = vld [vmem:[%s57 + $0x388] sm:$0xff]
    %v172 = vld [vmem:[%s57 + $0x390] sm:$0xff]
    %v173 = vld [vmem:[%s57 + $0x398] sm:$0xff]
    %v174 = vld [vmem:[%s57 + $0x3a0] sm:$0xff]
    %v175 = vld [vmem:[%s57 + $0x3a8] sm:$0xff]
    %v176 = vld [vmem:[%s57 + $0x3b0] sm:$0xff]
    %v177 = vld [vmem:[%s57 + $0x3b8] sm:$0xff]
    %v178 = vld [vmem:[%s57 + $0x3c0] sm:$0xff]
    %v179 = vld [vmem:[%s57 + $0x3c8] sm:$0xff]
    %v180 = vld [vmem:[%s57 + $0x3d0] sm:$0xff]
    %v181 = vld [vmem:[%s57 + $0x3d8] sm:$0xff]
    %v182 = vld [vmem:[%s57 + $0x3e0] sm:$0xff]
    %v183 = vld [vmem:[%s57 + $0x3e8] sm:$0xff]
    %v184 = vld [vmem:[%s57 + $0x3f0] sm:$0xff]
    %v185 = vld [vmem:[%s57 + $0x3f8] sm:$0xff]
    %v186 = vld [vmem:[#allocation2] sm:$0xff]
    %187 = vmatprep.subr.mxu0 0.0
    %188 = vmatpush1.msra.mxu0 %v73
    %189 = vmatprep.subr.mxu0 0.0
    %190 = vmatpush1.msra.mxu0 %v72
    %191 = vmatprep.subr.mxu0 0.0
    %192 = vmatpush1.msra.mxu0 %v71
    %193 = vmatprep.subr.mxu0 0.0
    %194 = vmatpush1.msra.mxu0 %v70
    %195 = vmatprep.subr.mxu0 0.0
    %196 = vmatpush1.msra.mxu0 %v69
    %197 = vmatprep.subr.mxu0 0.0
    %198 = vmatpush1.msra.mxu0 %v68
    %199 = vmatprep.subr.mxu0 0.0
    %200 = vmatpush1.msra.mxu0 %v67
    %201 = vmatprep.subr.mxu0 0.0
    %202 = vmatpush1.msra.mxu0 %v66
    %203 = vmatprep.subr.mxu0 0.0
    %204 = vmatpush1.msra.mxu0 %v65
    %205 = vmatprep.subr.mxu0 0.0
    %206 = vmatpush1.msra.mxu0 %v64
    %207 = vmatprep.subr.mxu0 0.0
    %208 = vmatpush1.msra.mxu0 %v63
    %209 = vmatprep.subr.mxu0 0.0
    %210 = vmatpush1.msra.mxu0 %v62
    %211 = vmatprep.subr.mxu0 0.0
    %212 = vmatpush1.msra.mxu0 %v61
    %213 = vmatprep.subr.mxu0 0.0
    %214 = vmatpush1.msra.mxu0 %v60
    %215 = vmatprep.subr.mxu0 0.0
    %216 = vmatpush1.msra.mxu0 %v59
    %217 = vmatprep.subr.mxu0 0.0
    %218 = vmatpush1.msra.mxu0 %v58
    %219 = vmatprep.subr.mxu0 0.0
    %220 = vmatpush2.msra.mxu0 %v89
    %221 = vmatprep.subr.mxu0 0.0
    %222 = vmatpush2.msra.mxu0 %v88
    %223 = vmatprep.subr.mxu0 0.0
    %224 = vmatpush2.msra.mxu0 %v87
    %225 = vmatprep.subr.mxu0 0.0
    %226 = vmatpush2.msra.mxu0 %v86
    %227 = vmatprep.subr.mxu0 0.0
    %228 = vmatpush2.msra.mxu0 %v85
    %229 = vmatprep.subr.mxu0 0.0
    %230 = vmatpush2.msra.mxu0 %v84
    %231 = vmatprep.subr.mxu0 0.0
    %232 = vmatpush2.msra.mxu0 %v83
    %233 = vmatprep.subr.mxu0 0.0
    %234 = vmatpush2.msra.mxu0 %v82
    %235 = vmatprep.subr.mxu0 0.0
    %236 = vmatpush2.msra.mxu0 %v81
    %237 = vmatprep.subr.mxu0 0.0
    %238 = vmatpush2.msra.mxu0 %v80
    %239 = vmatprep.subr.mxu0 0.0
    %240 = vmatpush2.msra.mxu0 %v79
    %241 = vmatprep.subr.mxu0 0.0
    %242 = vmatpush2.msra.mxu0 %v78
    %243 = vmatprep.subr.mxu0 0.0
    %244 = vmatpush2.msra.mxu0 %v77
    %245 = vmatprep.subr.mxu0 0.0
    %246 = vmatpush2.msra.mxu0 %v76
    %247 = vmatprep.subr.mxu0 0.0
    %248 = vmatpush2.msra.mxu0 %v75
    %249 = vmatprep.subr.mxu0 0.0
    %250 = vmatpush2.msra.mxu0 %v74
    %251 = vmatprep.mubr.f32.mxu0 %v49
    %252 = vmatmul.mubr.f32.gmra.mxu0 %v48
    %v253 = vpop.f32.mrf.mxu0
    %v254 = vadd.f32 0.0, %v253
    %v255 = vpop.f32.mrf.mxu0
    %256 = vdwg.mxu0
    %257 = vmatprep.subr.mxu0 0.0
    %258 = vmatpush1.msra.mxu0 %v105
    %259 = vmatprep.subr.mxu0 0.0
    %260 = vmatpush1.msra.mxu0 %v104
    %261 = vmatprep.subr.mxu0 0.0
    %262 = vmatpush1.msra.mxu0 %v103
    %263 = vmatprep.subr.mxu0 0.0
    %264 = vmatpush1.msra.mxu0 %v102
    %265 = vmatprep.subr.mxu0 0.0
    %266 = vmatpush1.msra.mxu0 %v101
    %267 = vmatprep.subr.mxu0 0.0
    %268 = vmatpush1.msra.mxu0 %v100
    %269 = vmatprep.subr.mxu0 0.0
    %270 = vmatpush1.msra.mxu0 %v99
    %271 = vmatprep.subr.mxu0 0.0
    %272 = vmatpush1.msra.mxu0 %v98
    %273 = vmatprep.subr.mxu0 0.0
    %274 = vmatpush1.msra.mxu0 %v97
    %275 = vmatprep.subr.mxu0 0.0
    %276 = vmatpush1.msra.mxu0 %v96
    %277 = vmatprep.subr.mxu0 0.0
    %278 = vmatpush1.msra.mxu0 %v95
    %279 = vmatprep.subr.mxu0 0.0
    %280 = vmatpush1.msra.mxu0 %v94
    %281 = vmatprep.subr.mxu0 0.0
    %282 = vmatpush1.msra.mxu0 %v93
    %283 = vmatprep.subr.mxu0 0.0
    %284 = vmatpush1.msra.mxu0 %v92
    %285 = vmatprep.subr.mxu0 0.0
    %286 = vmatpush1.msra.mxu0 %v91
    %287 = vmatprep.subr.mxu0 0.0
    %288 = vmatpush1.msra.mxu0 %v90
    %289 = vmatprep.subr.mxu0 0.0
    %290 = vmatpush2.msra.mxu0 %v121
    %291 = vmatprep.subr.mxu0 0.0
    %292 = vmatpush2.msra.mxu0 %v120
    %293 = vmatprep.subr.mxu0 0.0
    %294 = vmatpush2.msra.mxu0 %v119
    %295 = vmatprep.subr.mxu0 0.0
    %296 = vmatpush2.msra.mxu0 %v118
    %297 = vmatprep.subr.mxu0 0.0
    %298 = vmatpush2.msra.mxu0 %v117
    %299 = vmatprep.subr.mxu0 0.0
    %300 = vmatpush2.msra.mxu0 %v116
    %301 = vmatprep.subr.mxu0 0.0
    %302 = vmatpush2.msra.mxu0 %v115
    %303 = vmatprep.subr.mxu0 0.0
    %304 = vmatpush2.msra.mxu0 %v114
    %305 = vmatprep.subr.mxu0 0.0
    %306 = vmatpush2.msra.mxu0 %v113
    %307 = vmatprep.subr.mxu0 0.0
    %308 = vmatpush2.msra.mxu0 %v112
    %309 = vmatprep.subr.mxu0 0.0
    %310 = vmatpush2.msra.mxu0 %v111
    %311 = vmatprep.subr.mxu0 0.0
    %312 = vmatpush2.msra.mxu0 %v110
    %313 = vmatprep.subr.mxu0 0.0
    %314 = vmatpush2.msra.mxu0 %v109
    %315 = vmatprep.subr.mxu0 0.0
    %316 = vmatpush2.msra.mxu0 %v108
    %317 = vmatprep.subr.mxu0 0.0
    %318 = vmatpush2.msra.mxu0 %v107
    %319 = vmatprep.subr.mxu0 0.0
    %320 = vmatpush2.msra.mxu0 %v106
    %321 = vmatprep.mubr.f32.mxu0 %v51
    %322 = vmatmul.mubr.f32.gmra.mxu0 %v50
    %v323 = vpop.f32.mrf.mxu0
    %v324 = vadd.f32 %v254, %v323
    %v325 = vpop.f32.mrf.mxu0
    %326 = vdwg.mxu0
    %327 = vmatprep.subr.mxu0 0.0
    %328 = vmatpush1.msra.mxu0 %v137
    %329 = vmatprep.subr.mxu0 0.0
    %330 = vmatpush1.msra.mxu0 %v136
    %331 = vmatprep.subr.mxu0 0.0
    %332 = vmatpush1.msra.mxu0 %v135
    %333 = vmatprep.subr.mxu0 0.0
    %334 = vmatpush1.msra.mxu0 %v134
    %335 = vmatprep.subr.mxu0 0.0
    %336 = vmatpush1.msra.mxu0 %v133
    %337 = vmatprep.subr.mxu0 0.0
    %338 = vmatpush1.msra.mxu0 %v132
    %339 = vmatprep.subr.mxu0 0.0
    %340 = vmatpush1.msra.mxu0 %v131
    %341 = vmatprep.subr.mxu0 0.0
    %342 = vmatpush1.msra.mxu0 %v130
    %343 = vmatprep.subr.mxu0 0.0
    %344 = vmatpush1.msra.mxu0 %v129
    %345 = vmatprep.subr.mxu0 0.0
    %346 = vmatpush1.msra.mxu0 %v128
    %347 = vmatprep.subr.mxu0 0.0
    %348 = vmatpush1.msra.mxu0 %v127
    %349 = vmatprep.subr.mxu0 0.0
    %350 = vmatpush1.msra.mxu0 %v126
    %351 = vmatprep.subr.mxu0 0.0
    %352 = vmatpush1.msra.mxu0 %v125
    %353 = vmatprep.subr.mxu0 0.0
    %354 = vmatpush1.msra.mxu0 %v124
    %355 = vmatprep.subr.mxu0 0.0
    %356 = vmatpush1.msra.mxu0 %v123
    %357 = vmatprep.subr.mxu0 0.0
    %358 = vmatpush1.msra.mxu0 %v122
    %359 = vmatprep.subr.mxu0 0.0
    %360 = vmatpush2.msra.mxu0 %v153
    %361 = vmatprep.subr.mxu0 0.0
    %362 = vmatpush2.msra.mxu0 %v152
    %363 = vmatprep.subr.mxu0 0.0
    %364 = vmatpush2.msra.mxu0 %v151
    %365 = vmatprep.subr.mxu0 0.0
    %366 = vmatpush2.msra.mxu0 %v150
    %367 = vmatprep.subr.mxu0 0.0
    %368 = vmatpush2.msra.mxu0 %v149
    %369 = vmatprep.subr.mxu0 0.0
    %370 = vmatpush2.msra.mxu0 %v148
    %371 = vmatprep.subr.mxu0 0.0
    %372 = vmatpush2.msra.mxu0 %v147
    %373 = vmatprep.subr.mxu0 0.0
    %374 = vmatpush2.msra.mxu0 %v146
    %375 = vmatprep.subr.mxu0 0.0
    %376 = vmatpush2.msra.mxu0 %v145
    %377 = vmatprep.subr.mxu0 0.0
    %378 = vmatpush2.msra.mxu0 %v144
    %379 = vmatprep.subr.mxu0 0.0
    %380 = vmatpush2.msra.mxu0 %v143
    %381 = vmatprep.subr.mxu0 0.0
    %382 = vmatpush2.msra.mxu0 %v142
    %383 = vmatprep.subr.mxu0 0.0
    %384 = vmatpush2.msra.mxu0 %v141
    %385 = vmatprep.subr.mxu0 0.0
    %386 = vmatpush2.msra.mxu0 %v140
    %387 = vmatprep.subr.mxu0 0.0
    %388 = vmatpush2.msra.mxu0 %v139
    %389 = vmatprep.subr.mxu0 0.0
    %390 = vmatpush2.msra.mxu0 %v138
    %391 = vmatprep.mubr.f32.mxu0 %v53
    %392 = vmatmul.mubr.f32.gmra.mxu0 %v52
    %v393 = vpop.f32.mrf.mxu0
    %v394 = vadd.f32 %v324, %v393
    %v395 = vpop.f32.mrf.mxu0
    %396 = vdwg.mxu0
    %397 = vmatprep.subr.mxu0 0.0
    %398 = vmatpush1.msra.mxu0 %v169
    %399 = vmatprep.subr.mxu0 0.0
    %400 = vmatpush1.msra.mxu0 %v168
    %401 = vmatprep.subr.mxu0 0.0
    %402 = vmatpush1.msra.mxu0 %v167
    %403 = vmatprep.subr.mxu0 0.0
    %404 = vmatpush1.msra.mxu0 %v166
    %405 = vmatprep.subr.mxu0 0.0
    %406 = vmatpush1.msra.mxu0 %v165
    %407 = vmatprep.subr.mxu0 0.0
    %408 = vmatpush1.msra.mxu0 %v164
    %409 = vmatprep.subr.mxu0 0.0
    %410 = vmatpush1.msra.mxu0 %v163
    %411 = vmatprep.subr.mxu0 0.0
    %412 = vmatpush1.msra.mxu0 %v162
    %413 = vmatprep.subr.mxu0 0.0
    %414 = vmatpush1.msra.mxu0 %v161
    %415 = vmatprep.subr.mxu0 0.0
    %416 = vmatpush1.msra.mxu0 %v160
    %417 = vmatprep.subr.mxu0 0.0
    %418 = vmatpush1.msra.mxu0 %v159
    %419 = vmatprep.subr.mxu0 0.0
    %420 = vmatpush1.msra.mxu0 %v158
    %421 = vmatprep.subr.mxu0 0.0
    %422 = vmatpush1.msra.mxu0 %v157
    %423 = vmatprep.subr.mxu0 0.0
    %424 = vmatpush1.msra.mxu0 %v156
    %425 = vmatprep.subr.mxu0 0.0
    %426 = vmatpush1.msra.mxu0 %v155
    %427 = vmatprep.subr.mxu0 0.0
    %428 = vmatpush1.msra.mxu0 %v154
    %429 = vmatprep.subr.mxu0 0.0
    %430 = vmatpush2.msra.mxu0 %v185
    %431 = vmatprep.subr.mxu0 0.0
    %432 = vmatpush2.msra.mxu0 %v184
    %433 = vmatprep.subr.mxu0 0.0
    %434 = vmatpush2.msra.mxu0 %v183
    %435 = vmatprep.subr.mxu0 0.0
    %436 = vmatpush2.msra.mxu0 %v182
    %437 = vmatprep.subr.mxu0 0.0
    %438 = vmatpush2.msra.mxu0 %v181
    %439 = vmatprep.subr.mxu0 0.0
    %440 = vmatpush2.msra.mxu0 %v180
    %441 = vmatprep.subr.mxu0 0.0
    %442 = vmatpush2.msra.mxu0 %v179
    %443 = vmatprep.subr.mxu0 0.0
    %444 = vmatpush2.msra.mxu0 %v178
    %445 = vmatprep.subr.mxu0 0.0
    %446 = vmatpush2.msra.mxu0 %v177
    %447 = vmatprep.subr.mxu0 0.0
    %448 = vmatpush2.msra.mxu0 %v176
    %449 = vmatprep.subr.mxu0 0.0
    %450 = vmatpush2.msra.mxu0 %v175
    %451 = vmatprep.subr.mxu0 0.0
    %452 = vmatpush2.msra.mxu0 %v174
    %453 = vmatprep.subr.mxu0 0.0
    %454 = vmatpush2.msra.mxu0 %v173
    %455 = vmatprep.subr.mxu0 0.0
    %456 = vmatpush2.msra.mxu0 %v172
    %457 = vmatprep.subr.mxu0 0.0
    %458 = vmatpush2.msra.mxu0 %v171
    %459 = vmatprep.subr.mxu0 0.0
    %460 = vmatpush2.msra.mxu0 %v170
    %461 = vmatprep.mubr.f32.mxu0 %v55
    %462 = vmatmul.mubr.f32.gmra.mxu0 %v54
    %v463 = vpop.f32.mrf.mxu0
    %v464 = vadd.f32 %v394, %v463
    %v465 = vpop.f32.mrf.mxu0
    %466 = vdwg.mxu0
    %v467 = vadd.f32 %v186, %v464
    %468 = vst [vmem:[#allocation2] sm:$0xff] %v467
    // Predicated region
    $region30: #{tpu_custom_call.1} parent=1 // pred_check
      %p469 = pneg %p43
    $region31: #{tpu_custom_call.1} parent=1 // pred_check_branch
      %471 = sbr.rel (%p469) target = $region33
    $region32: #{tpu_custom_call.1} parent=1 // pred_region
      %v472 = vld [vmem:[#allocation2] sm:$0xff]
      %v473 = vld [vmem:[%s2] sm:$0x1]
      %v475 = vlaneseq
      %v476 = vshrl.u32 %v475, 7
      %v477 = vsub.s32 0, %v476
      %v478 = vrot.slane %v473, %v477
      %v480 = vadd.f32 %v472, %v478
      %481 = vmax.xlane.f32.xlu0 %v480
      %v482 = vpop.xlane.xlu0 %481
      %v483 = vsub.f32 %v480, %v482
      %v484 = vmul.f32 %v483, 1.442695
      %v485 = vpow.pop %v484
      %486 = vadd.xlane.f32.xlu0 %v485
      %v487 = vpop.xlane.xlu0 %486
      %v488 = vlog2.pop %v487
      %v489 = vmul.f32 %v488, 0.6931472
      %v490 = vadd.f32 %v482, %v489
      %v491 = vld [vmem:[%s3] sm:$0xff]
      %v492 = vlaneseq
      %v493 = vand.u32 %v492, 127
      %494 = vset.pattern.permute.xlu0 0
      %495 = vperm.xlu0 %494, %v491
      %v496 = vpop.permute.xlu0 %495
      %vm497 = vcmp.eq.s32.totalorder %v493, %v496
      %v498 = vsel %vm497, %v480, 0.0
      %499 = vadd.xlane.f32.xlu0 %v498
      %v500 = vpop.xlane.xlu0 %499
      %v501 = vsub.f32 %v500, %v490
      %vm502 = vcmask 7168
      %503 = vst.msk [vmem:[%s4] sm:$0xff] %vm502, %v501
    $region33: #{tpu_custom_call.1} parent=1 // pred_fallthru
      _
    // Predicated region
    $region34: #{tpu_custom_call.1} parent=1 // pred_check
      _
    $region35: #{tpu_custom_call.1} parent=1 // pred_check_branch
      %505 = sbr.rel (0) target = $region37
    $region36: #{tpu_custom_call.1} parent=1 // pred_region
      _
    $region37: #{tpu_custom_call.1} parent=1 // pred_fallthru
      _
    // Predicated region
    $region38: #{tpu_custom_call.1} parent=1 // pred_check
      _
    $region39: #{tpu_custom_call.1} parent=1 // pred_check_branch
      %507 = sbr.rel (0) target = $region41
    $region40: #{tpu_custom_call.1} parent=1 // pred_region
      _
    $region41: #{tpu_custom_call.1} parent=1 // pred_fallthru
      _
    %508 = vsyncpa [#allocation4], 1
    %509 = vsyncpa [#allocation6], 1

</llo_original>
